<compile_context>
chip_gen: v7x
topology: tpu7x:2x2x1
jax: 0.10.0
libtpu: 0.0.40
codegen_flags: <defaults>
</compile_context>

<pallas_src>
import functools

import jax
import jax.numpy as jnp
from jax.experimental import pallas as pl
from jax.experimental.pallas import tpu as pltpu


# --------------------------------------------------------------------------
# Pallas kernel: per-level masked ranking-score map (one (C, T) lane tile).
# --------------------------------------------------------------------------
def _fcos_score_kernel(pre_nms_thresh, cls_ref, ctr_ref, scores_ref):
    # cls_ref:    (1, C, T)  classification logits
    # ctr_ref:    (1, 1, T)  centerness logits
    # scores_ref: (1, C, T)  bf16: cls_prob*ctr_prob if candidate else -1
    cls_prob = jax.nn.sigmoid(cls_ref[0].astype(jnp.float32))   # (C, T)
    ctr_prob = jax.nn.sigmoid(ctr_ref[0].astype(jnp.float32))   # (1, T)
    cand = cls_prob > pre_nms_thresh                            # on cls alone
    score = cls_prob * ctr_prob                                 # ranking score
    scores_ref[0] = jnp.where(cand, score, -1.0).astype(scores_ref.dtype)


def fcos_masked_scores(box_cls, box_center, *, pre_nms_thresh,
                       max_lane_tile=8192):
    """(N, C, H, W) + (N, 1, H, W) logits -> (N, C, H*W) bf16 masked scores.

    No padding copies; native-dtype inputs are DMA'd directly and cast to f32
    inside the kernel.
    """
    N, C, H, W = box_cls.shape
    HW = H * W
    cls = box_cls.reshape(N, C, HW)       # pure view of NCHW
    ctr = box_center.reshape(N, 1, HW)

    max_lane_tile = max(128, (max_lane_tile // 128) * 128)
    if HW <= max_lane_tile:
        # Full-extent lane block: legal even when HW is not a multiple of 128.
        T, nt = HW, 1
    else:
        # Multiple-of-128 tile; tail tile's out-of-bounds writes are masked.
        T = max_lane_tile
        nt = -(-HW // T)

    kernel = functools.partial(_fcos_score_kernel, float(pre_nms_thresh))
    return pl.pallas_call(
        kernel,
        grid=(N, nt),
        in_specs=[
            pl.BlockSpec((1, C, T), lambda n, t: (n, 0, t)),
            pl.BlockSpec((1, 1, T), lambda n, t: (n, 0, t)),
        ],
        out_specs=pl.BlockSpec((1, C, T), lambda n, t: (n, 0, t)),
        out_shape=jax.ShapeDtypeStruct((N, C, HW), jnp.bfloat16),
        compiler_params=pltpu.CompilerParams(
            dimension_semantics=("parallel", "parallel"),
            vmem_limit_bytes=32 * 1024 * 1024),
    )(cls, ctr)


# --------------------------------------------------------------------------
# Plain-JAX glue: padded top-k selection + K-only box decode / clip / sqrt.
# --------------------------------------------------------------------------
def select_and_decode_level(scores, box_reg, locations, image_sizes, k):
    """scores: (N, C, HW) bf16 masked scores; box_reg: (N, 4, H, W);
    locations: (HW, 2) [x, y]; image_sizes: (N, 2) int [h, w].
    Returns (labels (N,K), sqrt-scores (N,K), boxes (N,K,4), valid (N,K))."""
    N, C, HW = scores.shape
    flat = scores.reshape(N, C * HW)
    top_vals, top_idx = jax.lax.top_k(flat, k)                  # (N, K)
    labels = (top_idx // HW + 1).astype(jnp.int32)              # classes 1-based
    hw_idx = top_idx % HW
    valid = top_vals > -0.5                                     # sentinel test

    # Gather regression / locations at only the K selected anchors.
    reg = box_reg.reshape(box_reg.shape[0], 4, HW)
    idx = jnp.broadcast_to(hw_idx[:, None, :], (N, 4, k))
    reg_sel = jnp.transpose(
        jnp.take_along_axis(reg.astype(jnp.float32), idx, axis=2), (0, 2, 1))
    loc_sel = jnp.take(locations.astype(jnp.float32), hw_idx, axis=0)   # (N,K,2)

    x, y = loc_sel[..., 0], loc_sel[..., 1]
    l, t = reg_sel[..., 0], reg_sel[..., 1]
    r, b = reg_sel[..., 2], reg_sel[..., 3]
    det = jnp.stack([x - l, y - t, x + r, y + b], axis=-1)      # (N, K, 4)

    # clip_to_image (TO_REMOVE = 1)
    h = image_sizes[:, 0].astype(jnp.float32)
    w = image_sizes[:, 1].astype(jnp.float32)
    bounds = jnp.stack([w - 1.0, h - 1.0, w - 1.0, h - 1.0], axis=1)    # (N, 4)
    det = jnp.clip(det, 0.0, bounds[:, None, :])

    out_scores = jnp.sqrt(jnp.maximum(top_vals.astype(jnp.float32), 0.0))
    return labels, out_scores, det, valid


def fcos_post_forward(locations, box_cls, box_regression, centerness,
                      image_sizes, *, pre_nms_thresh, pre_nms_top_n):
    """Full forward: per-level Pallas kernels + padded per-image concatenation.

    Returns a padded detection tensor (N, L*K, 6) with columns
    [label, score, x1, y1, x2, y2] and a boolean validity mask (N, L*K).
    """
    # TODO(synk): optional structural opts — fuse the FPN levels into a single
    # pallas_call along the HW axis and/or emit a per-tile top-k inside the
    # kernel to avoid the full score writeback; skipped to keep per-level
    # top-N semantics and avoid an extra concat copy of box_cls.
    all_labels, all_scores, all_boxes, all_valid = [], [], [], []
    for loc, cls_p, reg_p, ctr_p in zip(locations, box_cls,
                                        box_regression, centerness):
        s = fcos_masked_scores(cls_p, ctr_p, pre_nms_thresh=pre_nms_thresh)
        lab, sc, bx, va = select_and_decode_level(
            s, reg_p, loc, image_sizes, pre_nms_top_n)
        all_labels.append(lab)
        all_scores.append(sc)
        all_boxes.append(bx)
        all_valid.append(va)

    labels = jnp.concatenate(all_labels, axis=1)             # (N, L*K)
    scores = jnp.concatenate(all_scores, axis=1)             # (N, L*K)
    boxes = jnp.concatenate(all_boxes, axis=1)               # (N, L*K, 4)
    valid = jnp.concatenate(all_valid, axis=1)               # (N, L*K)

    detections = jnp.concatenate(
        [labels[..., None].astype(jnp.float32),
         scores[..., None],
         boxes], axis=-1)                                    # (N, L*K, 6)

    # TODO(synk): per-class NMS (torchvision ops.nms), kthvalue-based post-NMS
    # top-N filtering and remove_small_boxes are data-dependent / sequential
    # and have no clean Pallas equivalent; left to downstream host code.
    return detections, valid


# --------------------------------------------------------------------------
# Helpers for deterministic synthetic inputs.
# --------------------------------------------------------------------------
def compute_locations(h, w, stride):
    ys = (jnp.arange(h, dtype=jnp.float32) * stride + stride // 2)
    xs = (jnp.arange(w, dtype=jnp.float32) * stride + stride // 2)
    yy, xx = jnp.meshgrid(ys, xs, indexing="ij")
    return jnp.stack([xx.reshape(-1), yy.reshape(-1)], axis=1)   # (H*W, 2) = (x, y)


if __name__ == "__main__":
    # cfg-equivalent constants (no learned parameters in this module)
    PRE_NMS_THRESH = 0.05
    PRE_NMS_TOP_N = 50
    NUM_CLASSES = 5                      # -> C = NUM_CLASSES - 1 = 4 logits

    N = 2
    C = NUM_CLASSES - 1
    level_shapes = [(16, 16, 8), (8, 8, 16)]   # (H, W, stride) per FPN level

    key = jax.random.PRNGKey(0)
    locations, box_cls, box_regression, centerness = [], [], [], []
    for (H, W, stride) in level_shapes:
        key, k1, k2, k3 = jax.random.split(key, 4)
        box_cls.append(jax.random.normal(k1, (N, C, H, W), jnp.float32) - 2.0)
        box_regression.append(
            jnp.abs(jax.random.normal(k2, (N, 4, H, W), jnp.float32)) * stride * 2.0)
        centerness.append(jax.random.normal(k3, (N, 1, H, W), jnp.float32))
        locations.append(compute_locations(H, W, stride))

    image_sizes = jnp.array([[120, 128], [110, 100]], dtype=jnp.int32)  # (h, w)

    detections, valid = fcos_post_forward(
        locations, box_cls, box_regression, centerness, image_sizes,
        pre_nms_thresh=PRE_NMS_THRESH, pre_nms_top_n=PRE_NMS_TOP_N)

    detections = jax.block_until_ready(detections)
    valid = jax.block_until_ready(valid)

    assert detections.shape == (N, len(level_shapes) * PRE_NMS_TOP_N, 6)
    assert valid.shape == (N, len(level_shapes) * PRE_NMS_TOP_N)
    assert bool(jnp.all(jnp.isfinite(detections)))
    print("KERNEL_OK")
</pallas_src>

<mosaic_0001>
module attributes {stable_mosaic.version = 11 : i64} {
  func.func @_fcos_score_kernel(%arg0: i32, %arg1: i32, %arg2: memref<1x4x256xf32, #tpu.memory_space<vmem>>, %arg3: memref<1x1x256xf32, #tpu.memory_space<vmem>>, %arg4: memref<1x4x256xbf16, #tpu.memory_space<vmem>>) attributes {dimension_semantics = [#tpu.dimension_semantics<parallel>, #tpu.dimension_semantics<parallel>], iteration_bounds = array<i64: 2, 1>, scalar_prefetch = 0 : i64, scratch_operands = 0 : i64, tpu.core_type = #tpu.core_type<tc>, window_params = [{transform_indices = @transform_0, window_bounds = array<i64: 1, 4, 256>}, {transform_indices = @transform_1, window_bounds = array<i64: 1, 1, 256>}, {transform_indices = @transform_2, window_bounds = array<i64: 1, 4, 256>}]} {
    %c0 = arith.constant 0 : index
    %c0_0 = arith.constant 0 : index
    %c0_1 = arith.constant 0 : index
    %0 = vector.load %arg2[%c0, %c0_0, %c0_1] : memref<1x4x256xf32, #tpu.memory_space<vmem>>, vector<1x4x256xf32>
    %1 = vector.shape_cast %0 : vector<1x4x256xf32> to vector<4x256xf32>
    %2 = arith.negf %1 : vector<4x256xf32>
    %3 = math.exp %2 : vector<4x256xf32>
    %cst = arith.constant 1.000000e+00 : f32
    %4 = vector.broadcast %cst : f32 to vector<4x256xf32>
    %5 = arith.addf %4, %3 : vector<4x256xf32>
    %6 = arith.divf %4, %5 : vector<4x256xf32>
    %c0_2 = arith.constant 0 : index
    %c0_3 = arith.constant 0 : index
    %c0_4 = arith.constant 0 : index
    %7 = vector.load %arg3[%c0_2, %c0_3, %c0_4] : memref<1x1x256xf32, #tpu.memory_space<vmem>>, vector<1x1x256xf32>
    %8 = vector.shape_cast %7 : vector<1x1x256xf32> to vector<1x256xf32>
    %9 = arith.negf %8 : vector<1x256xf32>
    %10 = math.exp %9 : vector<1x256xf32>
    %cst_5 = arith.constant 1.000000e+00 : f32
    %11 = vector.broadcast %cst_5 : f32 to vector<1x256xf32>
    %12 = arith.addf %11, %10 : vector<1x256xf32>
    %13 = arith.divf %11, %12 : vector<1x256xf32>
    %cst_6 = arith.constant 5.000000e-02 : f32
    %14 = vector.broadcast %cst_6 : f32 to vector<4x256xf32>
    %15 = arith.cmpf ogt, %6, %14 : vector<4x256xf32>
    %16 = vector.broadcast %13 : vector<1x256xf32> to vector<4x256xf32>
    %17 = arith.mulf %6, %16 : vector<4x256xf32>
    %cst_7 = arith.constant -1.000000e+00 : f32
    %18 = vector.broadcast %cst_7 : f32 to vector<4x256xf32>
    %19 = arith.select %15, %17, %18 : vector<4x256xi1>, vector<4x256xf32>
    %20 = arith.truncf %19 : vector<4x256xf32> to vector<4x256xbf16>
    %c0_8 = arith.constant 0 : index
    %c0_9 = arith.constant 0 : index
    %c0_10 = arith.constant 0 : index
    %21 = vector.load %arg4[%c0_8, %c0_9, %c0_10] : memref<1x4x256xbf16, #tpu.memory_space<vmem>>, vector<1x4x256xbf16>
    %22 = vector.shape_cast %21 : vector<1x4x256xbf16> to vector<4x256xbf16>
    %23 = vector.shape_cast %20 : vector<4x256xbf16> to vector<1x4x256xbf16>
    tpu.vector_store %arg4[%c0_8, %c0_9, %c0_10], %23 {strides = array<i32>} : memref<1x4x256xbf16, #tpu.memory_space<vmem>>, vector<1x4x256xbf16>,
    return
  }
  func.func @transform_0(%arg0: i32, %arg1: i32) -> (i32, i32, i32) {
    %c0_i32 = arith.constant 0 : i32
    %c0_i32_0 = arith.constant 0 : i32
    return %arg0, %c0_i32, %arg1 : i32, i32, i32
  }
  func.func @transform_1(%arg0: i32, %arg1: i32) -> (i32, i32, i32) {
    %c0_i32 = arith.constant 0 : i32
    %c0_i32_0 = arith.constant 0 : i32
    return %arg0, %c0_i32, %arg1 : i32, i32, i32
  }
  func.func @transform_2(%arg0: i32, %arg1: i32) -> (i32, i32, i32) {
    %c0_i32 = arith.constant 0 : i32
    %c0_i32_0 = arith.constant 0 : i32
    return %arg0, %c0_i32, %arg1 : i32, i32, i32
  }
}

</mosaic_0001>

<llo_original>
// kernel: tpu_custom_call.1
$region0: #{tpu_custom_call.1}
  #allocation0 [shape = 'u32[]', space=smem, size = 0x4, offset = 0x4, fixed_abs, tag = 'smem constant byte address 0x4 - core index']
  #allocation1 [shape = 'u32[144,128]{1,0:T(1,128)}', space=vmem, size = 0x12000, scoped, tag = 'internal scratch']
  %s0 = inlined_call_operand.hbm [shape: f32[2,4,256], index: 0, kind: input, shape index: {}]
  %s1 = inlined_call_operand.hbm [shape: f32[2,1,256], index: 1, kind: input, shape index: {}]
  %s2 = inlined_call_operand.hbm [shape: bf16[2,4,256], index: 2, kind: output, shape index: {}]
  %s3 = sld [smem:[#allocation0]]
  $region49: #{tpu_custom_call.1} parent=0
    _
  %s5 = ssub.s32 1, %s3
  %s6 = scalar_select 0, %s5, %s3
  $region1: #{tpu_custom_call.1} parent=0
    #allocation2 [shape = 'u8[8192]{0}', space=vmem, size = 0x2000, scoped, tag = 'input window, operand 0']
    #allocation3 [shape = 's32[2]{0}', space=sflag, size = 0x8, scoped, tag = 'scoped memory for tpu_custom_call.1']
    #allocation4 [shape = 's32[2]{0}', space=sflag, size = 0x8, scoped, tag = 'scoped memory for tpu_custom_call.1']
    #allocation5 [shape = 'u8[2048]{0}', space=vmem, size = 0x800, scoped, tag = 'input window, operand 1']
    #allocation6 [shape = 's32[2]{0}', space=sflag, size = 0x8, scoped, tag = 'scoped memory for tpu_custom_call.1']
    #allocation7 [shape = 'u8[4096]{0}', space=vmem, size = 0x1000, scoped, tag = 'output window, operand 0']
    %7 = vsyncpa [#allocation3], 0
    %s8 = scalar_lea.sflag [#allocation3], 1
    %9 = vsyncpa %s8, 0
    %10 = vsyncpa [#allocation6], 0
    %s11 = scalar_lea.sflag [#allocation6], 1
    %12 = vsyncpa %s11, 0
    %13 = vsyncpa [#allocation4], 0
    %s14 = scalar_lea.sflag [#allocation4], 1
    %15 = vsyncpa %s14, 0
    loop: start=0, step=1, limit=4
    $region2: #{tpu_custom_call.1} parent=1 // loop_pre_header
      _
    $region3: #{tpu_custom_call.1} parent=1 // loop_header
      %s17 = sphi 0, %s21
      %p18 = scmp.ge.s32.totalorder %s17, 4
      %s24 = sphi 0, %s36
      %s25 = sphi 0, %s32
      %s26 = sphi 0, %s24
      %s27 = sphi 0, %s25
      %s28 = sphi 0, %s26
      %s29 = sphi 0, %s27
      %s41 = sphi 0, %s43
      %s44 = sphi 0, %s41
      %s45 = sphi 0, %s44
      %s61 = sphi 0, %s45
      %s69 = sphi 0, %s71
      %s72 = sphi 0, %s69
      %s73 = sphi 0, %s72
      %s89 = sphi 0, %s73
      %s97 = sphi 0, %s99
      %s100 = sphi 0, %s97
      %s101 = sphi 0, %s100
      %s117 = sphi 0, %s101
    $region4: #{tpu_custom_call.1} parent=1 // loop_header_branch
      %20 = sbr.rel (%p18) target = $region8
    $region5: #{tpu_custom_call.1} parent=1 // loop_body
      %s22 = ssub.s32 %s17, 1
      %s23 = ssub.s32 %s17, 2
      %s30 = sadd.s32 1, %s25
      %p31 = scmp.ge.s32.totalorder %s30, 1
      %s32 = scalar_select %p31, 0, %s30
      %s33 = sadd.s32 1, %s24
      %s34 = scalar_select %p31, %s33, %s24
      %p35 = scmp.ge.s32.totalorder %s34, 2
      %s36 = scalar_select %p35, 0, %s34
      %s37 = ssub.s32 %s24, %s36
      %s38 = ssub.s32 %s25, %s32
      %s39 = sor.u32 %s37, %s38
      %p40 = scmp.eq.s32.totalorder %s39, 0
      %s42 = sadd.s32 %s41, 1
      %s43 = scalar_select %p40, %s41, %s42
      %p46 = pneg %p40
      %p47 = scmp.eq.s32.totalorder %s17, 1
      %p48 = por %p46, %p47
      %p49 = scmp.ne.s32.totalorder %s41, %s44
      %p50 = scmp.eq.s32.totalorder %s17, 0
      %p51 = por %p49, %p50
      %p52 = scmp.ne.s32.totalorder %s41, %s44
      %p53 = scmp.eq.s32.totalorder %s22, 1
      %p54 = por %p52, %p53
      %p55 = scmp.ne.s32.totalorder %s44, %s45
      %p56 = scmp.eq.s32.totalorder %s22, 0
      %p57 = por %p55, %p56
      %p58 = scmp.ne.s32.totalorder %s44, %s45
      %p59 = scmp.eq.s32.totalorder %s23, 1
      %p60 = por %p58, %p59
      %p62 = scmp.ne.s32.totalorder %s45, %s61
      %p63 = scmp.eq.s32.totalorder %s23, 0
      %p64 = por %p62, %p63
      %s65 = ssub.s32 %s24, %s36
      %s66 = ssub.s32 %s25, %s32
      %s67 = sor.u32 %s65, %s66
      %p68 = scmp.eq.s32.totalorder %s67, 0
      %s70 = sadd.s32 %s69, 1
      %s71 = scalar_select %p68, %s69, %s70
      %p74 = pneg %p68
      %p75 = scmp.eq.s32.totalorder %s17, 1
      %p76 = por %p74, %p75
      %p77 = scmp.ne.s32.totalorder %s69, %s72
      %p78 = scmp.eq.s32.totalorder %s17, 0
      %p79 = por %p77, %p78
      %p80 = scmp.ne.s32.totalorder %s69, %s72
      %p81 = scmp.eq.s32.totalorder %s22, 1
      %p82 = por %p80, %p81
      %p83 = scmp.ne.s32.totalorder %s72, %s73
      %p84 = scmp.eq.s32.totalorder %s22, 0
      %p85 = por %p83, %p84
      %p86 = scmp.ne.s32.totalorder %s72, %s73
      %p87 = scmp.eq.s32.totalorder %s23, 1
      %p88 = por %p86, %p87
      %p90 = scmp.ne.s32.totalorder %s73, %s89
      %p91 = scmp.eq.s32.totalorder %s23, 0
      %p92 = por %p90, %p91
      %s93 = ssub.s32 %s24, %s36
      %s94 = ssub.s32 %s25, %s32
      %s95 = sor.u32 %s93, %s94
      %p96 = scmp.eq.s32.totalorder %s95, 0
      %s98 = sadd.s32 %s97, 1
      %s99 = scalar_select %p96, %s97, %s98
      %p102 = pneg %p96
      %p103 = scmp.eq.s32.totalorder %s17, 1
      %p104 = por %p102, %p103
      %p105 = scmp.ne.s32.totalorder %s97, %s100
      %p106 = scmp.eq.s32.totalorder %s17, 0
      %p107 = por %p105, %p106
      %p108 = scmp.ne.s32.totalorder %s97, %s100
      %p109 = scmp.eq.s32.totalorder %s22, 1
      %p110 = por %p108, %p109
      %p111 = scmp.ne.s32.totalorder %s100, %s101
      %p112 = scmp.eq.s32.totalorder %s22, 0
      %p113 = por %p111, %p112
      %p114 = scmp.ne.s32.totalorder %s100, %s101
      %p115 = scmp.eq.s32.totalorder %s23, 1
      %p116 = por %p114, %p115
      %p118 = scmp.ne.s32.totalorder %s101, %s117
      %p119 = scmp.eq.s32.totalorder %s23, 0
      %p120 = por %p118, %p119
      %p121 = scmp.le.s32.totalorder 1, %s17
      %p122 = scmp.lt.s32.totalorder %s17, 3
      %p123 = pnand %p121, %p122
      %p124 = pneg %p123
      // Predicated region
      $region9: #{tpu_custom_call.1} parent=5 // pred_check
        _
      $region10: #{tpu_custom_call.1} parent=5 // pred_check_branch
        %126 = sbr.rel (%p123) target = $region12
      $region11: #{tpu_custom_call.1} parent=5 // pred_region
        %s127 = ssub.s32 %s17, 1
      $region12: #{tpu_custom_call.1} parent=5 // pred_fallthru
        _
      %p128 = scmp.lt.s32.totalorder %s17, 2
      // Predicated region
      $region13: #{tpu_custom_call.1} parent=5 // pred_check
        %p129 = pneg %p128
      $region14: #{tpu_custom_call.1} parent=5 // pred_check_branch
        %131 = sbr.rel (%p129) target = $region16
      $region15: #{tpu_custom_call.1} parent=5 // pred_region
        // Predicated region
        $region17: #{tpu_custom_call.1} parent=15 // pred_check
          %p132 = pneg %p51
        $region18: #{tpu_custom_call.1} parent=15 // pred_check_branch
          %134 = sbr.rel (%p132) target = $region20
        $region19: #{tpu_custom_call.1} parent=15 // pred_region
          %s135 = sand.u32 %s41, 1
          %s136 = scalar_lea.sflag [#allocation3], %s135
          %s137 = sand.u32 %s41, 1
          %s138 = smul.addr %s137, 8
          %s139 = scalar_lea.vmem [#allocation2], %s138
          %s140 = smul.u32 2, %s25
          %s142 = ssub.s32 128, 128
          %143 = vsyncadd %s136, %s142
          %s144 = smul.addr %s24, 2
          %s145 = sadd.s32 %s140, %s144
          %s146 = smul.addr %s145, 64
          %s147 = scalar_lea.hbm %s0, %s146
          %s149 = sshll.u32 %s139, 4
          %s150 = int_to_ptr.vmem [resolvable:$true] %s149
          %152 = dma.hbm_to_vmem [thread:$0]  %s147, 128, %s150, %s136
        $region20: #{tpu_custom_call.1} parent=15 // pred_fallthru
          _
        // Predicated region
        $region21: #{tpu_custom_call.1} parent=15 // pred_check
          %p153 = pneg %p79
        $region22: #{tpu_custom_call.1} parent=15 // pred_check_branch
          %155 = sbr.rel (%p153) target = $region24
        $region23: #{tpu_custom_call.1} parent=15 // pred_region
          %s156 = sand.u32 %s69, 1
          %s157 = scalar_lea.sflag [#allocation6], %s156
          %s158 = sand.u32 %s69, 1
          %s159 = smul.addr %s158, 2
          %s160 = scalar_lea.vmem [#allocation5], %s159
          %s161 = smul.u32 2, %s25
          %s163 = ssub.s32 32, 32
          %164 = vsyncadd %s157, %s163
          %s165 = smul.addr %s24, 2
          %s166 = sadd.s32 %s161, %s165
          %s167 = smul.addr %s166, 16
          %s168 = scalar_lea.hbm %s1, %s167
          %s170 = sshll.u32 %s160, 4
          %s171 = int_to_ptr.vmem [resolvable:$true] %s170
          %173 = dma.hbm_to_vmem [thread:$0]  %s168, 32, %s171, %s157
        $region24: #{tpu_custom_call.1} parent=15 // pred_fallthru
          _
      $region16: #{tpu_custom_call.1} parent=5 // pred_fallthru
        _
      %p174 = scmp.le.s32.totalorder 1, %s17
      %p175 = scmp.lt.s32.totalorder %s17, 3
      %p176 = pnand %p174, %p175
      %p177 = pneg %p176
      // Predicated region
      $region25: #{tpu_custom_call.1} parent=5 // pred_check
        _
      $region26: #{tpu_custom_call.1} parent=5 // pred_check_branch
        %179 = sbr.rel (%p176) target = $region28
      $region27: #{tpu_custom_call.1} parent=5 // pred_region
        %s180 = ssub.s32 %s17, 1
        %s181 = sand.u32 %s44, 1
        %s182 = scalar_lea.sflag [#allocation3], %s181
        %s183 = sand.u32 %s44, 1
        %s184 = smul.addr %s183, 8
        %s185 = scalar_lea.vmem [#allocation2], %s184
        // Predicated region
        $region29: #{tpu_custom_call.1} parent=27 // pred_check
          %p186 = pneg %p57
        $region30: #{tpu_custom_call.1} parent=27 // pred_check_branch
          %188 = sbr.rel (%p186) target = $region32
        $region31: #{tpu_custom_call.1} parent=27 // pred_region
          %189 = dma.done %s182, 128
        $region32: #{tpu_custom_call.1} parent=27 // pred_fallthru
          _
        %s190 = sand.u32 %s72, 1
        %s191 = scalar_lea.sflag [#allocation6], %s190
        %s192 = sand.u32 %s72, 1
        %s193 = smul.addr %s192, 2
        %s194 = scalar_lea.vmem [#allocation5], %s193
        // Predicated region
        $region33: #{tpu_custom_call.1} parent=27 // pred_check
          %p195 = pneg %p85
        $region34: #{tpu_custom_call.1} parent=27 // pred_check_branch
          %197 = sbr.rel (%p195) target = $region36
        $region35: #{tpu_custom_call.1} parent=27 // pred_region
          %198 = dma.done %s191, 32
        $region36: #{tpu_custom_call.1} parent=27 // pred_fallthru
          _
        %s199 = sand.u32 %s44, 1
        %s200 = scalar_lea.sflag [#allocation3], %s199
        %s201 = sand.u32 %s44, 1
        %s202 = smul.addr %s201, 8
        %s203 = scalar_lea.vmem [#allocation2], %s202
        %p204 = pneg %p57
        %p205 = pneg %p54
        %s206 = sand.u32 %s72, 1
        %s207 = scalar_lea.sflag [#allocation6], %s206
        %s208 = sand.u32 %s72, 1
        %s209 = smul.addr %s208, 2
        %s210 = scalar_lea.vmem [#allocation5], %s209
        %p211 = pneg %p85
        %p212 = pneg %p82
        %p213 = pneg %p113
        %p214 = pneg %p110
        %s215 = sand.u32 %s100, 1
        %s216 = scalar_lea.sflag [#allocation4], %s215
        %s217 = sand.u32 %s100, 1
        %s218 = smul.addr %s217, 4
        %s219 = scalar_lea.vmem [#allocation7], %s218
        %s220 = smul.u32 2, %s27
        %s221 = smul.u32 2, %s27
        %s222 = smul.u32 2, %s27
        %v223 = vld [vmem:[%s185] sm:$0xff]
        %v224 = vxor.u32 %v223, 2147483648
        %v225 = vmul.f32 %v224, 1.442695
        %v226 = vpow.pop %v225
        %v227 = vadd.f32 %v226, 1.0
        %v228 = vrcp.pop %v227
        %v229 = vmul.f32 1.0, %v228
        %v230 = vld [vmem:[%s194] sm:$0x3]
        %v231 = vxor.u32 %v230, 2147483648
        %v232 = vmul.f32 %v231, 1.442695
        %v233 = vpow.pop %v232
        %v234 = vadd.f32 %v233, 1.0
        %v235 = vrcp.pop %v234
        %v236 = vmul.f32 1.0, %v235
        %vm237 = vcmp.gt.f32.partialorder %v229, 0.05
        %v239 = vlaneseq
        %v240 = vshrl.u32 %v239, 7
        %v241 = vsub.s32 0, %v240
        %v242 = vrot.slane %v236, %v241
        %v243 = vlaneseq
        %v244 = vshrl.u32 %v243, 7
        %v245 = vsub.s32 1, %v244
        %v246 = vrot.slane %v236, %v245
        %v247 = vcombine.low %v242, %v246
        %v249 = vmul.f32 %v229, %v247
        %v250 = vsel %vm237, %v249, -1.0
        %v252 = vcombine.high %v250, %v250
        %v254 = vpack.c.bf16 %v250, %v250
        %v255 = vpack.c.bf16 %v252, %v252
        %v258 = vcombine.low %v254, %v255
        %v260 = vunpack.c.l.s4 1983009808
        %v261 = vunpack.c.0.s8 %v260
        %v262 = vlaneseq
        %v263 = vshrl.u32 %v262, 7
        %v264 = vsub.s32 %v261, %v263
        %v265 = vrot.slane %v258, %v264
        %267 = vst [vmem:[%s219] sm:$0xf] %v265
        %s268 = sand.u32 %s100, 1
        %s269 = scalar_lea.sflag [#allocation4], %s268
        %s270 = sand.u32 %s100, 1
        %s271 = smul.addr %s270, 4
        %s272 = scalar_lea.vmem [#allocation7], %s271
        // Predicated region
        $region37: #{tpu_custom_call.1} parent=27 // pred_check
          %p273 = pneg %p110
        $region38: #{tpu_custom_call.1} parent=27 // pred_check_branch
          %275 = sbr.rel (%p273) target = $region40
        $region39: #{tpu_custom_call.1} parent=27 // pred_region
          %s276 = smul.u32 2, %s27
          %s278 = ssub.s32 64, 64
          %279 = vsyncadd %s269, %s278
          %s280 = smul.addr %s26, 2
          %s281 = sadd.s32 %s276, %s280
          %s282 = smul.addr %s281, 32
          %s283 = scalar_lea.hbm %s2, %s282
          %s285 = sshll.u32 %s272, 4
          %s286 = int_to_ptr.vmem [resolvable:$true] %s285
          %288 = dma.vmem_to_hbm [thread:$0]  %s286, 64, %s283, %s269
        $region40: #{tpu_custom_call.1} parent=27 // pred_fallthru
          _
      $region28: #{tpu_custom_call.1} parent=5 // pred_fallthru
        _
      %p289 = scmp.le.s32.totalorder 2, %s17
      // Predicated region
      $region41: #{tpu_custom_call.1} parent=5 // pred_check
        %p290 = pneg %p289
      $region42: #{tpu_custom_call.1} parent=5 // pred_check_branch
        %292 = sbr.rel (%p290) target = $region44
      $region43: #{tpu_custom_call.1} parent=5 // pred_region
        %s293 = ssub.s32 %s17, 2
        // Predicated region
        $region45: #{tpu_custom_call.1} parent=43 // pred_check
          %p294 = pneg %p116
        $region46: #{tpu_custom_call.1} parent=43 // pred_check_branch
          %296 = sbr.rel (%p294) target = $region48
        $region47: #{tpu_custom_call.1} parent=43 // pred_region
          %s297 = sand.u32 %s101, 1
          %s298 = scalar_lea.sflag [#allocation4], %s297
          %s299 = sand.u32 %s101, 1
          %s300 = smul.addr %s299, 4
          %s301 = scalar_lea.vmem [#allocation7], %s300
          %302 = dma.done %s298, 64
        $region48: #{tpu_custom_call.1} parent=43 // pred_fallthru
          _
      $region44: #{tpu_custom_call.1} parent=5 // pred_fallthru
        _
    $region6: #{tpu_custom_call.1} parent=1 // loop_footer
      %s21 = sadd.s32 1, %s17
    $region7: #{tpu_custom_call.1} parent=1 // loop_footer_branch
      %16 = sbr.rel target = $region3
    $region8: #{tpu_custom_call.1} parent=1 // loop_exit
      _
    %303 = vsyncpa [#allocation3], 1
    %s304 = scalar_lea.sflag [#allocation3], 1
    %305 = vsyncpa %s304, 1
    %306 = vsyncpa [#allocation6], 1
    %s307 = scalar_lea.sflag [#allocation6], 1
    %308 = vsyncpa %s307, 1
    %309 = vsyncpa [#allocation4], 1
    %s310 = scalar_lea.sflag [#allocation4], 1
    %311 = vsyncpa %s310, 1

</llo_original>
